<compile_context>
chip_gen: v7x
topology: tpu7x:2x2x1
jax: 0.10.0
libtpu: 0.0.40
codegen_flags: <defaults>
</compile_context>

<pallas_src>
import numpy as np
import jax
import jax.numpy as jnp
from jax.experimental import pallas as pl
from jax.experimental.pallas import tpu as pltpu


def _make_flops_kernel(segments, p, weight, lower_w, inv_t_flops, c_total):
    """segments: tuple of (start, length, A_i, B_i) with Python-float coeffs."""
    p = float(p)
    weight = float(weight)
    lower_w = float(lower_w)
    inv_t_flops = float(inv_t_flops)
    inv_p = 1.0 / p
    c_total = float(c_total)
    hi_clamp = p + 0.005
    lo_clamp = p - 0.005

    def kernel(x_ref, out_ref):
        # x_ref: (1, N_pad) f32 in VMEM.  out_ref: (1, 1) f32 in SMEM.
        sum_flops = jnp.full((1, 1), c_total, dtype=jnp.float32)
        for start, length, a_i, b_i in segments:
            # Static compile-time slice of the arch-param row; per-segment
            # channel count is a cheap lane reduce (VPU/XLU only -- no MXU,
            # no mask matrix, no coefficient DMAs).
            c = jnp.sum(x_ref[:, start:start + length], axis=1, keepdims=True)
            sum_flops = sum_flops + (a_i * c + b_i * (c * c))

        ratio = sum_flops * inv_t_flops                      # (1, 1)
        over = ratio > p
        # Single log: select the argument first, then one EUP transcendental.
        arg = jnp.where(over,
                        jnp.maximum(ratio, hi_clamp) * inv_p,
                        p / jnp.minimum(ratio, lo_clamp))
        scale = jnp.where(over, weight, weight * lower_w)
        loss = scale * jnp.log(arg)                          # (1, 1)
        out_ref[0, 0] = loss[0, 0]

    return kernel


class FlopsConstraintMobnet:
    """JAX/Pallas port of Flops_constraint_mobnet (HN=True path)."""

    def __init__(self, p, kernel_size, out_size, group_size,
                 size_inchannel, size_outchannel, in_channel=3, w=2,
                 HN=False, structure=None):
        # TODO(synk): HN=False path requires the external `custom_STE` autograd
        # function (not defined in utils.py); only HN=True is implemented.
        assert HN and structure is not None, "only HN=True is supported"

        self.p = float(p)
        self.weight = float(w)
        self.lower_w = 10.0
        self.structure = [int(s) for s in structure]

        k = [float(v) for v in kernel_size]
        o = [float(v) for v in out_size]
        g = [float(v) for v in group_size]
        ic = [float(v) for v in size_inchannel]
        oc = [float(v) for v in size_outchannel]

        # init_total_flops()
        t_flops = 0.0
        for i in range(len(k)):
            t_flops += k[i] * (ic[i] / g[i]) * oc[i] * o[i] + 3.0 * oc[i] * o[i]
        self.t_flops = t_flops

        # Per-segment polynomial  flops_i(c) = A_i*c + B_i*c^2 + C_i,
        # with coefficients baked as compile-time Python-float constants.
        segments = []
        c_total = 0.0
        start = 0
        for i, length in enumerate(self.structure):
            a_i = (k[3 * i] * (ic[3 * i] / g[3 * i]) * o[3 * i]
                   + 3.0 * o[3 * i]
                   + 3.0 * o[3 * i + 1]
                   + k[3 * i + 2] * (oc[3 * i + 2] / g[3 * i + 2]) * o[3 * i + 2])
            b_i = k[3 * i + 1] * o[3 * i + 1] / g[3 * i + 1]
            c_total += 3.0 * oc[3 * i + 2] * o[3 * i + 2]
            segments.append((start, int(length), a_i, b_i))
            start += int(length)

        self.N = start
        self.N_pad = ((self.N + 127) // 128) * 128  # lane-dense, unmasked vld

        kernel = _make_flops_kernel(tuple(segments), self.p, self.weight,
                                    self.lower_w, 1.0 / t_flops, c_total)

        call = pl.pallas_call(
            kernel,
            out_shape=jax.ShapeDtypeStruct((1, 1), jnp.float32),
            in_specs=[pl.BlockSpec(memory_space=pltpu.MemorySpace.VMEM)],
            out_specs=pl.BlockSpec(memory_space=pltpu.MemorySpace.SMEM),
        )

        n, n_pad = self.N, self.N_pad

        def _forward(x):
            x_row = jnp.reshape(x.astype(jnp.float32), (1, n))
            x_row = jnp.pad(x_row, ((0, 0), (0, n_pad - n)))
            return call(x_row)[0, 0]

        # Trace/compile once; repeated calls are dispatch-only.
        self._forward = jax.jit(_forward)

    def __call__(self, x):
        return self._forward(x)


def _reference_loss(x, p, w, lower_w, k, o, g, ic, oc, structure, t_flops):
    """Direct numpy transcription of the PyTorch forward (HN=True)."""
    arch, start = [], 0
    for length in structure:
        arch.append(x[start:start + length])
        start += length
    sum_flops = 0.0
    for i in range(len(arch)):
        c = float(np.sum(arch[i]))
        sum_flops += k[3 * i] * (ic[3 * i] / g[3 * i]) * c * o[3 * i] + 3 * c * o[3 * i]
        sum_flops += k[3 * i + 1] * (c / g[3 * i + 1]) * c * o[3 * i + 1] + 3 * c * o[3 * i + 1]
        sum_flops += (k[3 * i + 2] * (c / g[3 * i + 2]) * oc[3 * i + 2] * o[3 * i + 2]
                      + 3 * oc[3 * i + 2] * o[3 * i + 2])
    ratio = sum_flops / t_flops
    if ratio > p:
        loss = np.log(max(ratio, p + 0.005) / p)
    else:
        loss = lower_w * np.log(p / min(ratio, p - 0.005))
    return w * loss


if __name__ == "__main__":
    # Small MobileNet-like config: 4 inverted-residual blocks, each with
    # (1x1 expand, 3x3 depthwise, 1x1 project).
    structure = [8, 8, 8, 8]
    spatial = 16 * 16
    kernel_size, out_size, group_size, in_csize, out_csize = [], [], [], [], []
    base_in = 4
    for i, cmid in enumerate(structure):
        cin = base_in * (i + 1)
        cout = base_in * (i + 2)
        kernel_size += [1, 9, 1]
        out_size += [spatial, spatial, spatial]
        group_size += [1, cmid, 1]          # depthwise conv grouped by channels
        in_csize += [cin, cmid, cmid]
        out_csize += [cmid, cmid, cout]

    p = 0.5
    mod = FlopsConstraintMobnet(p, kernel_size, out_size, group_size,
                                in_csize, out_csize, in_channel=3, w=2,
                                HN=True, structure=structure)

    key = jax.random.PRNGKey(0)
    x = jax.random.uniform(key, (sum(structure),), dtype=jnp.float32)

    loss = mod(x)
    loss = jax.block_until_ready(loss)
    # call again to exercise the cached/compiled path
    loss2 = jax.block_until_ready(mod(x))

    ref = _reference_loss(np.asarray(x), p, 2.0, 10.0, kernel_size, out_size,
                          group_size, in_csize, out_csize, structure, mod.t_flops)
    assert np.isfinite(float(loss))
    assert abs(float(loss) - ref) <= 1e-3 * max(1.0, abs(ref)), (float(loss), ref)
    assert abs(float(loss2) - float(loss)) <= 1e-6
    print("KERNEL_OK")
</pallas_src>

<mosaic_0001>
module attributes {stable_mosaic.version = 11 : i64} {
  func.func @kernel(%arg0: memref<1x128xf32, #tpu.memory_space<vmem>>, %arg1: memref<1x1xf32, #tpu.memory_space<smem>>) attributes {dimension_semantics = [], scalar_prefetch = 0 : i64, scratch_operands = 0 : i64, tpu.core_type = #tpu.core_type<tc>} {
    %cst = arith.constant 4.300800e+04 : f32
    %0 = vector.broadcast %cst : f32 to vector<1x1xf32>
    %c0 = arith.constant 0 : index
    %c0_0 = arith.constant 0 : index
    %1 = vector.load %arg0[%c0, %c0_0] : memref<1x128xf32, #tpu.memory_space<vmem>>, vector<1x8xf32>
    %cst_1 = arith.constant dense<0.000000e+00> : vector<1xf32>
    %2 = vector.multi_reduction <add>, %1, %cst_1 [1] : vector<1x8xf32> to vector<1xf32>
    %3 = vector.shape_cast %2 : vector<1xf32> to vector<1x1xf32>
    %cst_2 = arith.constant 4.608000e+03 : f32
    %4 = vector.broadcast %cst_2 : f32 to vector<1x1xf32>
    %5 = arith.mulf %4, %3 : vector<1x1xf32>
    %6 = arith.mulf %3, %3 : vector<1x1xf32>
    %cst_3 = arith.constant 2.880000e+02 : f32
    %7 = vector.broadcast %cst_3 : f32 to vector<1x1xf32>
    %8 = arith.mulf %7, %6 : vector<1x1xf32>
    %9 = arith.addf %5, %8 : vector<1x1xf32>
    %10 = arith.addf %0, %9 : vector<1x1xf32>
    %c0_4 = arith.constant 0 : index
    %c8 = arith.constant 8 : index
    %11 = vector.load %arg0[%c0_4, %c8] : memref<1x128xf32, #tpu.memory_space<vmem>>, vector<1x8xf32>
    %cst_5 = arith.constant dense<0.000000e+00> : vector<1xf32>
    %12 = vector.multi_reduction <add>, %11, %cst_5 [1] : vector<1x8xf32> to vector<1xf32>
    %13 = vector.shape_cast %12 : vector<1xf32> to vector<1x1xf32>
    %cst_6 = arith.constant 6.656000e+03 : f32
    %14 = vector.broadcast %cst_6 : f32 to vector<1x1xf32>
    %15 = arith.mulf %14, %13 : vector<1x1xf32>
    %16 = arith.mulf %13, %13 : vector<1x1xf32>
    %cst_7 = arith.constant 2.880000e+02 : f32
    %17 = vector.broadcast %cst_7 : f32 to vector<1x1xf32>
    %18 = arith.mulf %17, %16 : vector<1x1xf32>
    %19 = arith.addf %15, %18 : vector<1x1xf32>
    %20 = arith.addf %10, %19 : vector<1x1xf32>
    %c0_8 = arith.constant 0 : index
    %c16 = arith.constant 16 : index
    %21 = vector.load %arg0[%c0_8, %c16] : memref<1x128xf32, #tpu.memory_space<vmem>>, vector<1x8xf32>
    %cst_9 = arith.constant dense<0.000000e+00> : vector<1xf32>
    %22 = vector.multi_reduction <add>, %21, %cst_9 [1] : vector<1x8xf32> to vector<1xf32>
    %23 = vector.shape_cast %22 : vector<1xf32> to vector<1x1xf32>
    %cst_10 = arith.constant 8.704000e+03 : f32
    %24 = vector.broadcast %cst_10 : f32 to vector<1x1xf32>
    %25 = arith.mulf %24, %23 : vector<1x1xf32>
    %26 = arith.mulf %23, %23 : vector<1x1xf32>
    %cst_11 = arith.constant 2.880000e+02 : f32
    %27 = vector.broadcast %cst_11 : f32 to vector<1x1xf32>
    %28 = arith.mulf %27, %26 : vector<1x1xf32>
    %29 = arith.addf %25, %28 : vector<1x1xf32>
    %30 = arith.addf %20, %29 : vector<1x1xf32>
    %c0_12 = arith.constant 0 : index
    %c24 = arith.constant 24 : index
    %31 = vector.load %arg0[%c0_12, %c24] : memref<1x128xf32, #tpu.memory_space<vmem>>, vector<1x8xf32>
    %cst_13 = arith.constant dense<0.000000e+00> : vector<1xf32>
    %32 = vector.multi_reduction <add>, %31, %cst_13 [1] : vector<1x8xf32> to vector<1xf32>
    %33 = vector.shape_cast %32 : vector<1xf32> to vector<1x1xf32>
    %cst_14 = arith.constant 1.075200e+04 : f32
    %34 = vector.broadcast %cst_14 : f32 to vector<1x1xf32>
    %35 = arith.mulf %34, %33 : vector<1x1xf32>
    %36 = arith.mulf %33, %33 : vector<1x1xf32>
    %cst_15 = arith.constant 2.880000e+02 : f32
    %37 = vector.broadcast %cst_15 : f32 to vector<1x1xf32>
    %38 = arith.mulf %37, %36 : vector<1x1xf32>
    %39 = arith.addf %35, %38 : vector<1x1xf32>
    %40 = arith.addf %30, %39 : vector<1x1xf32>
    %cst_16 = arith.constant 2.75865114E-6 : f32
    %41 = vector.broadcast %cst_16 : f32 to vector<1x1xf32>
    %42 = arith.mulf %40, %41 : vector<1x1xf32>
    %cst_17 = arith.constant 5.000000e-01 : f32
    %43 = vector.broadcast %cst_17 : f32 to vector<1x1xf32>
    %44 = arith.cmpf ogt, %42, %43 : vector<1x1xf32>
    %cst_18 = arith.constant 5.050000e-01 : f32
    %45 = vector.broadcast %cst_18 : f32 to vector<1x1xf32>
    %46 = arith.maximumf %42, %45 : vector<1x1xf32>
    %cst_19 = arith.constant 2.000000e+00 : f32
    %47 = vector.broadcast %cst_19 : f32 to vector<1x1xf32>
    %48 = arith.mulf %46, %47 : vector<1x1xf32>
    %cst_20 = arith.constant 4.950000e-01 : f32
    %49 = vector.broadcast %cst_20 : f32 to vector<1x1xf32>
    %50 = arith.minimumf %42, %49 : vector<1x1xf32>
    %cst_21 = arith.constant 5.000000e-01 : f32
    %51 = vector.broadcast %cst_21 : f32 to vector<1x1xf32>
    %52 = arith.divf %51, %50 : vector<1x1xf32>
    %53 = arith.select %44, %48, %52 : vector<1x1xi1>, vector<1x1xf32>
    %cst_22 = arith.constant 2.000000e+00 : f32
    %cst_23 = arith.constant 2.000000e+01 : f32
    %54 = vector.broadcast %cst_22 : f32 to vector<1x1xf32>
    %55 = vector.broadcast %cst_23 : f32 to vector<1x1xf32>
    %56 = arith.select %44, %54, %55 : vector<1x1xi1>, vector<1x1xf32>
    %57 = math.log %53 : vector<1x1xf32>
    %58 = arith.mulf %56, %57 : vector<1x1xf32>
    %59 = vector.extract %58[0, 0] : f32 from vector<1x1xf32>
    %c0_24 = arith.constant 0 : index
    %c0_25 = arith.constant 0 : index
    %60 = memref.load %arg1[%c0_24, %c0_25] : memref<1x1xf32, #tpu.memory_space<smem>>
    memref.store %59, %arg1[%c0_24, %c0_25] : memref<1x1xf32, #tpu.memory_space<smem>>
    return
  }
}

</mosaic_0001>

<llo_original>
// kernel: _forward.1
$region0: #{_forward.1}
  #allocation0 [shape = 'u32[]', space=smem, size = 0x4, offset = 0x4, fixed_abs, tag = 'smem constant byte address 0x4 - core index']
  #allocation1 [shape = 'u32[144,128]{1,0:T(1,128)}', space=vmem, size = 0x12000, scoped, tag = 'internal scratch']
  %s0 = inlined_call_operand.vmem [shape: f32[1,128], index: 0, kind: input, shape index: {}]
  %s1 = inlined_call_operand.hbm [shape: f32[1,1], index: 1, kind: output, shape index: {}]
  %s2 = sld [smem:[#allocation0]]
  $region14: #{_forward.1} parent=0
    _
  %s4 = ssub.s32 1, %s2
  %s5 = scalar_select 0, %s4, %s2
  $region1: #{_forward.1} parent=0
    #allocation2 [shape = 'u8[512]{0}', space=smem, size = 0x200, scoped, tag = 'output window, operand 0, single buffered']
    #allocation3 [shape = 's32[1]{0}', space=sflag, size = 0x4, scoped, tag = 'scoped memory for _forward.1']
    %6 = vsyncpa [#allocation3], 0
    // Predicated region
    $region2: #{_forward.1} parent=1 // pred_check
      _
    $region3: #{_forward.1} parent=1 // pred_check_branch
      %8 = sbr.rel (0) target = $region5
    $region4: #{_forward.1} parent=1 // pred_region
      _
    $region5: #{_forward.1} parent=1 // pred_fallthru
      _
    %v9 = vld [vmem:[%s0] sm:$0x1]
    %vm10 = vcmask 57344
    %v11 = vsel %vm10, %v9, 0.0
    %12 = vadd.xlane.f32.xlu0 %v11
    %v13 = vpop.xlane.xlu0 %12
    %v14 = vmul.f32 %v13, 4608.0
    %v15 = vmul.f32 %v13, %v13
    %v16 = vmul.f32 %v15, 288.0
    %v17 = vadd.f32 %v14, %v16
    %v18 = vadd.f32 %v17, 43008.0
    %v20 = vlaneseq
    %v21 = vshrl.u32 %v20, 7
    %v22 = vsub.s32 0, %v21
    %v23 = vrot.slane %v9, %v22
    %24 = vrot.lane.b32.xlu0 %v23, 120
    %v25 = vpop.permute.xlu0 %24
    %v27 = vsel %vm10, %v25, 0.0
    %28 = vadd.xlane.f32.xlu0 %v27
    %v29 = vpop.xlane.xlu0 %28
    %v30 = vmul.f32 %v29, 6656.0
    %v31 = vmul.f32 %v29, %v29
    %v32 = vmul.f32 %v31, 288.0
    %v33 = vadd.f32 %v30, %v32
    %v34 = vadd.f32 %v18, %v33
    %35 = vrot.lane.b32.xlu0 %v23, 112
    %v36 = vpop.permute.xlu0 %35
    %v38 = vsel %vm10, %v36, 0.0
    %39 = vadd.xlane.f32.xlu0 %v38
    %v40 = vpop.xlane.xlu0 %39
    %v41 = vmul.f32 %v40, 8704.0
    %v42 = vmul.f32 %v40, %v40
    %v43 = vmul.f32 %v42, 288.0
    %v44 = vadd.f32 %v41, %v43
    %v45 = vadd.f32 %v34, %v44
    %46 = vrot.lane.b32.xlu0 %v23, 104
    %v47 = vpop.permute.xlu0 %46
    %v49 = vsel %vm10, %v47, 0.0
    %50 = vadd.xlane.f32.xlu0 %v49
    %v51 = vpop.xlane.xlu0 %50
    %v52 = vmul.f32 %v51, 10752.0
    %v53 = vmul.f32 %v51, %v51
    %v54 = vmul.f32 %v53, 288.0
    %v55 = vadd.f32 %v52, %v54
    %v56 = vadd.f32 %v45, %v55
    %v57 = vmul.f32 %v56, 2.7586511e-06
    %vm58 = vcmp.gt.f32.partialorder %v57, 0.5
    %v59 = vmax.f32 %v57, 0.505
    %v60 = vmul.f32 %v59, 2.0
    %v61 = vmin.f32 %v57, 0.495
    %v62 = vrcp.pop %v61
    %v63 = vmul.f32 0.5, %v62
    %v64 = vsel %vm58, %v60, %v63
    %v65 = vsel %vm58, 2.0, 20.0
    %v66 = vlog2.pop %v64
    %v67 = vmul.f32 %v66, 0.6931472
    %v68 = vmul.f32 %v65, %v67
    %s69 = vtos %v68
    %s70 = scalar_lea.smem [#allocation2], 0
    %71 = sst [smem:[%s70]] %s69
    // Predicated region
    $region6: #{_forward.1} parent=1 // pred_check
      _
    $region7: #{_forward.1} parent=1 // pred_check_branch
      %73 = sbr.rel (0) target = $region9
    $region8: #{_forward.1} parent=1 // pred_region
      %s75 = ssub.s32 16, 16
      %76 = vsyncadd [#allocation3], %s75
      %79 = dma.smem_to_hbm [#allocation2], 16, %s1, [#allocation3]
    $region9: #{_forward.1} parent=1 // pred_fallthru
      _
    // Predicated region
    $region10: #{_forward.1} parent=1 // pred_check
      _
    $region11: #{_forward.1} parent=1 // pred_check_branch
      %81 = sbr.rel (0) target = $region13
    $region12: #{_forward.1} parent=1 // pred_region
      %82 = dma.done [#allocation3], 16
    $region13: #{_forward.1} parent=1 // pred_fallthru
      _
    %83 = sfence
    %84 = vsyncpa [#allocation3], 1

</llo_original>
